<compile_context>
chip_gen: v6e
topology: v6e:2x2x1
jax: 0.10.0
libtpu: 0.0.40
codegen_flags: <defaults>
</compile_context>

<pallas_src>
import functools

import jax
import jax.numpy as jnp
from jax.experimental import pallas as pl
from jax.experimental.pallas import tpu as pltpu


def _round_up(x, m):
    return ((x + m - 1) // m) * m


# ---------------------------------------------------------------------------
# Kernel
# ---------------------------------------------------------------------------
def actor_critic_kernel(x_ref, p_ref, out_ref, *, s_pad, lane):
    """x_ref: (TB, S_pad); p_ref: packed param slab (rows, LANE);
    out_ref: (TB, LANE) with logits in [:, :A] and value in [:, A]."""
    # Static, 8-aligned row offsets into the param slab.
    w1_off = 0
    b1_off = w1_off + s_pad
    w2_off = b1_off + 8
    b2_off = w2_off + lane
    wh_off = b2_off + 8
    bh_off = wh_off + lane

    x = x_ref[...]                                  # (TB, S_pad)
    w1 = p_ref[w1_off:w1_off + s_pad, :]            # (S_pad, LANE)
    b1 = p_ref[b1_off:b1_off + 1, :]                # (1, LANE)
    w2 = p_ref[w2_off:w2_off + lane, :]             # (LANE, LANE)
    b2 = p_ref[b2_off:b2_off + 1, :]                # (1, LANE)
    wh = p_ref[wh_off:wh_off + lane, :]             # (LANE, LANE) fused heads
    bh = p_ref[bh_off:bh_off + 1, :]                # (1, LANE)

    # shared trunk: Linear -> ReLU -> Linear -> ReLU (f32 accumulate + epilogue)
    h1 = jnp.maximum(
        jnp.dot(x, w1, preferred_element_type=jnp.float32) + b1, 0.0)
    h2 = jnp.maximum(
        jnp.dot(h1, w2, preferred_element_type=jnp.float32) + b2, 0.0)

    # fused policy+value head -> one lane-dense store
    out_ref[...] = (
        jnp.dot(h2, wh, preferred_element_type=jnp.float32) + bh
    ).astype(out_ref.dtype)


# ---------------------------------------------------------------------------
# Parameter init / packing
# ---------------------------------------------------------------------------
def init_params(key, state_dim, hidden_dim, action_dim):
    """nn.Linear-style U(-1/sqrt(fan_in), 1/sqrt(fan_in)) init, weights stored
    as (in_features, out_features) so the kernel computes y = x @ W + b."""
    def linear(k, fan_in, fan_out):
        kw, kb = jax.random.split(k)
        bound = 1.0 / jnp.sqrt(fan_in)
        w = jax.random.uniform(kw, (fan_in, fan_out), jnp.float32, -bound, bound)
        b = jax.random.uniform(kb, (1, fan_out), jnp.float32, -bound, bound)
        return w, b

    k1, k2, k3, k4 = jax.random.split(key, 4)
    w1, b1 = linear(k1, state_dim, hidden_dim)
    w2, b2 = linear(k2, hidden_dim, hidden_dim)
    wp, bp = linear(k3, hidden_dim, action_dim)
    wv, bv = linear(k4, hidden_dim, 1)
    return dict(w1=w1, b1=b1, w2=w2, b2=b2, wp=wp, bp=bp, wv=wv, bv=bv)


def pack_params(p, state_dim, hidden_dim, action_dim):
    """Pack all params into one zero-padded, lane-dense (rows, LANE) f32 slab."""
    lane = max(_round_up(hidden_dim, 128), _round_up(action_dim + 1, 128))
    s_pad = _round_up(state_dim, 8)

    w1_off = 0
    b1_off = w1_off + s_pad
    w2_off = b1_off + 8
    b2_off = w2_off + lane
    wh_off = b2_off + 8
    bh_off = wh_off + lane
    rows = bh_off + 8

    H, A = hidden_dim, action_dim
    slab = jnp.zeros((rows, lane), jnp.float32)
    slab = slab.at[w1_off:w1_off + state_dim, :H].set(p["w1"])
    slab = slab.at[b1_off, :H].set(p["b1"][0])
    slab = slab.at[w2_off:w2_off + H, :H].set(p["w2"])
    slab = slab.at[b2_off, :H].set(p["b2"][0])
    # fused head: policy weights in cols [0:A], value weight in col A
    wh = jnp.concatenate([p["wp"], p["wv"]], axis=1)      # (H, A+1)
    bh = jnp.concatenate([p["bp"], p["bv"]], axis=1)      # (1, A+1)
    slab = slab.at[wh_off:wh_off + H, :A + 1].set(wh)
    slab = slab.at[bh_off, :A + 1].set(bh[0])

    meta = dict(s_pad=s_pad, lane=lane, state_dim=state_dim,
                hidden_dim=H, action_dim=A)
    return slab, meta


# ---------------------------------------------------------------------------
# Wrapper
# ---------------------------------------------------------------------------
def actor_critic_forward(state, slab, meta, *, block_b=256):
    """Fused ActorCritic forward. Returns (logits (B, A), value (B, 1))."""
    B, S = state.shape
    s_pad, lane, A = meta["s_pad"], meta["lane"], meta["action_dim"]

    # Batch tiling: TB multiple of 8, capped at block_b; pad B up to TB grid.
    tb = min(_round_up(B, 8), block_b)
    b_pad = _round_up(B, tb)

    x = state.astype(jnp.float32)
    if (b_pad, s_pad) != (B, S):
        x = jnp.zeros((b_pad, s_pad), jnp.float32).at[:B, :S].set(x)

    grid = (b_pad // tb,)
    kernel = functools.partial(actor_critic_kernel, s_pad=s_pad, lane=lane)

    flops = 2 * b_pad * (s_pad * lane + lane * lane + lane * lane)
    bytes_accessed = 4 * (x.size + slab.size + b_pad * lane)

    packed = pl.pallas_call(
        kernel,
        out_shape=jax.ShapeDtypeStruct((b_pad, lane), jnp.float32),
        grid=grid,
        in_specs=[
            pl.BlockSpec((tb, s_pad), lambda i: (i, 0)),      # batch-tiled states
            pl.BlockSpec(slab.shape, lambda i: (0, 0)),       # VMEM-resident params
        ],
        out_specs=pl.BlockSpec((tb, lane), lambda i: (i, 0)),  # lane-dense slab
        compiler_params=pltpu.CompilerParams(
            dimension_semantics=("parallel",)),
        cost_estimate=pl.CostEstimate(
            flops=flops, transcendentals=0, bytes_accessed=bytes_accessed),
    )(x, slab)

    logits = packed[:B, :A]
    value = packed[:B, A:A + 1]
    return logits, value


# ---------------------------------------------------------------------------
# Pure-JAX reference (matches the PyTorch module)
# ---------------------------------------------------------------------------
def reference_forward(state, p):
    h = jnp.maximum(state @ p["w1"] + p["b1"], 0.0)
    h = jnp.maximum(h @ p["w2"] + p["b2"], 0.0)
    return h @ p["wp"] + p["bp"], h @ p["wv"] + p["bv"]


if __name__ == "__main__":
    batch, state_dim, hidden_dim, action_dim = 8, 16, 32, 4

    key = jax.random.PRNGKey(0)
    k_state, k_params = jax.random.split(key)
    state = jax.random.normal(k_state, (batch, state_dim), jnp.float32)

    params = init_params(k_params, state_dim, hidden_dim, action_dim)
    slab, meta = pack_params(params, state_dim, hidden_dim, action_dim)

    logits, value = actor_critic_forward(state, slab, meta)
    jax.block_until_ready((logits, value))

    ref_logits, ref_value = reference_forward(state, params)
    assert logits.shape == (batch, action_dim)
    assert value.shape == (batch, 1)
    assert jnp.allclose(logits, ref_logits, atol=1e-5, rtol=1e-5)
    assert jnp.allclose(value, ref_value, atol=1e-5, rtol=1e-5)

    # TODO(synk): `act()` (softmax/Categorical sampling) is host-side RL glue in
    # the PyTorch spec and is intentionally left outside the kernel.
    print("KERNEL_OK")
</pallas_src>

<mosaic_0001>
module attributes {stable_mosaic.version = 11 : i64} {
  func.func @actor_critic_kernel(%arg0: i32, %arg1: memref<8x16xf32, #tpu.memory_space<vmem>>, %arg2: memref<296x128xf32, #tpu.memory_space<vmem>>, %arg3: memref<8x128xf32, #tpu.memory_space<vmem>>) attributes {dimension_semantics = [#tpu.dimension_semantics<parallel>], iteration_bounds = array<i64: 1>, scalar_prefetch = 0 : i64, scratch_operands = 0 : i64, tpu.core_type = #tpu.core_type<tc>, window_params = [{transform_indices = @transform_0, window_bounds = array<i64: 8, 16>}, {pipeline_mode = #tpu.pipeline_mode<synchronous>, transform_indices = @transform_1, window_bounds = array<i64: 296, 128>}, {transform_indices = @transform_2, window_bounds = array<i64: 8, 128>}]} {
    %c0 = arith.constant 0 : index
    %c0_0 = arith.constant 0 : index
    %0 = vector.load %arg1[%c0, %c0_0] : memref<8x16xf32, #tpu.memory_space<vmem>>, vector<8x16xf32>
    %c0_1 = arith.constant 0 : index
    %c0_2 = arith.constant 0 : index
    %1 = vector.load %arg2[%c0_1, %c0_2] : memref<296x128xf32, #tpu.memory_space<vmem>>, vector<16x128xf32>
    %c16 = arith.constant 16 : index
    %c0_3 = arith.constant 0 : index
    %2 = vector.load %arg2[%c16, %c0_3] : memref<296x128xf32, #tpu.memory_space<vmem>>, vector<1x128xf32>
    %c24 = arith.constant 24 : index
    %c0_4 = arith.constant 0 : index
    %3 = vector.load %arg2[%c24, %c0_4] : memref<296x128xf32, #tpu.memory_space<vmem>>, vector<128x128xf32>
    %c152 = arith.constant 152 : index
    %c0_5 = arith.constant 0 : index
    %4 = vector.load %arg2[%c152, %c0_5] : memref<296x128xf32, #tpu.memory_space<vmem>>, vector<1x128xf32>
    %c160 = arith.constant 160 : index
    %c0_6 = arith.constant 0 : index
    %5 = vector.load %arg2[%c160, %c0_6] : memref<296x128xf32, #tpu.memory_space<vmem>>, vector<128x128xf32>
    %c288 = arith.constant 288 : index
    %c0_7 = arith.constant 0 : index
    %6 = vector.load %arg2[%c288, %c0_7] : memref<296x128xf32, #tpu.memory_space<vmem>>, vector<1x128xf32>
    %cst = arith.constant dense<0.000000e+00> : vector<8x128xf32>
    %7 = tpu.matmul %0, %1, %cst {dimension_numbers = #tpu.dot_dimension_numbers<[1], [0], [0], [1], [0, 0, 1, 1], [], []>} : vector<8x16xf32>, vector<16x128xf32>, vector<8x128xf32> -> vector<8x128xf32>
    %8 = vector.broadcast %2 : vector<1x128xf32> to vector<8x128xf32>
    %9 = arith.addf %7, %8 : vector<8x128xf32>
    %cst_8 = arith.constant 0.000000e+00 : f32
    %10 = vector.broadcast %cst_8 : f32 to vector<8x128xf32>
    %11 = arith.maximumf %9, %10 : vector<8x128xf32>
    %cst_9 = arith.constant dense<0.000000e+00> : vector<8x128xf32>
    %12 = tpu.matmul %11, %3, %cst_9 {dimension_numbers = #tpu.dot_dimension_numbers<[1], [0], [0], [1], [0, 0, 1, 1], [], []>} : vector<8x128xf32>, vector<128x128xf32>, vector<8x128xf32> -> vector<8x128xf32>
    %13 = vector.broadcast %4 : vector<1x128xf32> to vector<8x128xf32>
    %14 = arith.addf %12, %13 : vector<8x128xf32>
    %cst_10 = arith.constant 0.000000e+00 : f32
    %15 = vector.broadcast %cst_10 : f32 to vector<8x128xf32>
    %16 = arith.maximumf %14, %15 : vector<8x128xf32>
    %cst_11 = arith.constant dense<0.000000e+00> : vector<8x128xf32>
    %17 = tpu.matmul %16, %5, %cst_11 {dimension_numbers = #tpu.dot_dimension_numbers<[1], [0], [0], [1], [0, 0, 1, 1], [], []>} : vector<8x128xf32>, vector<128x128xf32>, vector<8x128xf32> -> vector<8x128xf32>
    %18 = vector.broadcast %6 : vector<1x128xf32> to vector<8x128xf32>
    %19 = arith.addf %17, %18 : vector<8x128xf32>
    %c0_12 = arith.constant 0 : index
    %c0_13 = arith.constant 0 : index
    %20 = vector.load %arg3[%c0_12, %c0_13] : memref<8x128xf32, #tpu.memory_space<vmem>>, vector<8x128xf32>
    tpu.vector_store %arg3[%c0_12, %c0_13], %19 {strides = array<i32>} : memref<8x128xf32, #tpu.memory_space<vmem>>, vector<8x128xf32>,
    return
  }
  func.func @transform_0(%arg0: i32) -> (i32, i32) {
    %c0_i32 = arith.constant 0 : i32
    %c0_i32_0 = arith.constant 0 : i32
    return %arg0, %c0_i32 : i32, i32
  }
  func.func @transform_1(%arg0: i32) -> (i32, i32) {
    %c0_i32 = arith.constant 0 : i32
    %c0_i32_0 = arith.constant 0 : i32
    %c0_i32_1 = arith.constant 0 : i32
    return %c0_i32, %c0_i32_0 : i32, i32
  }
  func.func @transform_2(%arg0: i32) -> (i32, i32) {
    %c0_i32 = arith.constant 0 : i32
    %c0_i32_0 = arith.constant 0 : i32
    return %arg0, %c0_i32 : i32, i32
  }
}

</mosaic_0001>

<llo_original>
// kernel: tpu_custom_call.1
$region0: #{tpu_custom_call.1}
  #allocation0 [shape = 'u32[]', space=smem, size = 0x4, offset = 0x4, fixed_abs, tag = 'smem constant byte address 0x4 - core index']
  #allocation1 [shape = 'u32[144,128]{1,0:T(1,128)}', space=vmem, size = 0x12000, scoped, tag = 'internal scratch']
  %s0 = inlined_call_operand.hbm [shape: f32[8,16], index: 0, kind: input, shape index: {}]
  %s1 = inlined_call_operand.hbm [shape: f32[296,128], index: 1, kind: input, shape index: {}]
  %s2 = inlined_call_operand.hbm [shape: f32[8,128], index: 2, kind: output, shape index: {}]
  %s3 = sld [smem:[#allocation0]]
  $region26: #{tpu_custom_call.1} parent=0
    _
  %s5 = ssub.s32 1, %s3
  %s6 = scalar_select 0, %s5, %s3
  $region1: #{tpu_custom_call.1} parent=0
    #allocation2 [shape = 'u8[4096]{0}', space=vmem, size = 0x1000, scoped, tag = 'input window, operand 0, single buffered']
    #allocation3 [shape = 's32[1]{0}', space=sflag, size = 0x4, scoped, tag = 'scoped memory for tpu_custom_call.1']
    #allocation4 [shape = 's32[1]{0}', space=sflag, size = 0x4, scoped, tag = 'scoped memory for tpu_custom_call.1']
    #allocation5 [shape = 'u8[151552]{0}', space=vmem, size = 0x25000, scoped, tag = 'input window, operand 1, single buffered']
    #allocation6 [shape = 's32[1]{0}', space=sflag, size = 0x4, scoped, tag = 'scoped memory for tpu_custom_call.1']
    #allocation7 [shape = 'u8[4096]{0}', space=vmem, size = 0x1000, scoped, tag = 'output window, operand 0, single buffered']
    %7 = vsyncpa [#allocation3], 0
    %8 = vsyncpa [#allocation6], 0
    %9 = vsyncpa [#allocation4], 0
    // Predicated region
    $region2: #{tpu_custom_call.1} parent=1 // pred_check
      _
    $region3: #{tpu_custom_call.1} parent=1 // pred_check_branch
      %11 = sbr.rel (0) target = $region5
    $region4: #{tpu_custom_call.1} parent=1 // pred_region
      %s13 = ssub.s32 128, 128
      %14 = vsyncadd [#allocation3], %s13
      %s16 = sshll.u32 [#allocation2], 4
      %s17 = int_to_ptr.vmem [resolvable:$true] %s16
      %19 = dma.hbm_to_vmem [thread:$0]  %s0, 128, %s17, [#allocation3]
    $region5: #{tpu_custom_call.1} parent=1 // pred_fallthru
      _
    // Predicated region
    $region6: #{tpu_custom_call.1} parent=1 // pred_check
      _
    $region7: #{tpu_custom_call.1} parent=1 // pred_check_branch
      %21 = sbr.rel (0) target = $region9
    $region8: #{tpu_custom_call.1} parent=1 // pred_region
      %s23 = ssub.s32 4736, 4736
      %24 = vsyncadd [#allocation6], %s23
      %s25 = sshll.u32 [#allocation5], 4
      %s26 = int_to_ptr.vmem [resolvable:$true] %s25
      %31 = dma.hbm_to_vmem [thread:$0]  %s1, 4736, %s26, [#allocation6], 128, 128, 8
    $region9: #{tpu_custom_call.1} parent=1 // pred_fallthru
      _
    // Predicated region
    $region10: #{tpu_custom_call.1} parent=1 // pred_check
      _
    $region11: #{tpu_custom_call.1} parent=1 // pred_check_branch
      %33 = sbr.rel (0) target = $region13
    $region12: #{tpu_custom_call.1} parent=1 // pred_region
      %34 = dma.done [#allocation3], 128
    $region13: #{tpu_custom_call.1} parent=1 // pred_fallthru
      _
    // Predicated region
    $region14: #{tpu_custom_call.1} parent=1 // pred_check
      _
    $region15: #{tpu_custom_call.1} parent=1 // pred_check_branch
      %36 = sbr.rel (0) target = $region17
    $region16: #{tpu_custom_call.1} parent=1 // pred_region
      %37 = dma.done [#allocation6], 4736
    $region17: #{tpu_custom_call.1} parent=1 // pred_fallthru
      _
    %v38 = vld [vmem:[#allocation2] sm:$0xff]
    %v39 = vld [vmem:[#allocation5] sm:$0xff]
    %v40 = vld [vmem:[#allocation5 + $0x8] sm:$0xff]
    %v41 = vld [vmem:[#allocation5 + $0x10] sm:$0x1]
    %v42 = vld [vmem:[#allocation5 + $0x18] sm:$0xff]
    %v43 = vld [vmem:[#allocation5 + $0x20] sm:$0xff]
    %v44 = vld [vmem:[#allocation5 + $0x28] sm:$0xff]
    %v45 = vld [vmem:[#allocation5 + $0x30] sm:$0xff]
    %v46 = vld [vmem:[#allocation5 + $0x38] sm:$0xff]
    %v47 = vld [vmem:[#allocation5 + $0x40] sm:$0xff]
    %v48 = vld [vmem:[#allocation5 + $0x48] sm:$0xff]
    %v49 = vld [vmem:[#allocation5 + $0x50] sm:$0xff]
    %v50 = vld [vmem:[#allocation5 + $0x58] sm:$0xff]
    %v51 = vld [vmem:[#allocation5 + $0x60] sm:$0xff]
    %v52 = vld [vmem:[#allocation5 + $0x68] sm:$0xff]
    %v53 = vld [vmem:[#allocation5 + $0x70] sm:$0xff]
    %v54 = vld [vmem:[#allocation5 + $0x78] sm:$0xff]
    %v55 = vld [vmem:[#allocation5 + $0x80] sm:$0xff]
    %v56 = vld [vmem:[#allocation5 + $0x88] sm:$0xff]
    %v57 = vld [vmem:[#allocation5 + $0x90] sm:$0xff]
    %v58 = vld [vmem:[#allocation5 + $0x98] sm:$0x1]
    %v59 = vld [vmem:[#allocation5 + $0xa0] sm:$0xff]
    %v60 = vld [vmem:[#allocation5 + $0xa8] sm:$0xff]
    %v61 = vld [vmem:[#allocation5 + $0xb0] sm:$0xff]
    %v62 = vld [vmem:[#allocation5 + $0xb8] sm:$0xff]
    %v63 = vld [vmem:[#allocation5 + $0xc0] sm:$0xff]
    %v64 = vld [vmem:[#allocation5 + $0xc8] sm:$0xff]
    %v65 = vld [vmem:[#allocation5 + $0xd0] sm:$0xff]
    %v66 = vld [vmem:[#allocation5 + $0xd8] sm:$0xff]
    %v67 = vld [vmem:[#allocation5 + $0xe0] sm:$0xff]
    %v68 = vld [vmem:[#allocation5 + $0xe8] sm:$0xff]
    %v69 = vld [vmem:[#allocation5 + $0xf0] sm:$0xff]
    %v70 = vld [vmem:[#allocation5 + $0xf8] sm:$0xff]
    %v71 = vld [vmem:[#allocation5 + $0x100] sm:$0xff]
    %v72 = vld [vmem:[#allocation5 + $0x108] sm:$0xff]
    %v73 = vld [vmem:[#allocation5 + $0x110] sm:$0xff]
    %v74 = vld [vmem:[#allocation5 + $0x118] sm:$0xff]
    %v75 = vld [vmem:[#allocation5 + $0x120] sm:$0x1]
    %v76 = vlaneseq
    %v77 = vshrl.u32 %v76, 7
    %v78 = vsub.s32 0, %v77
    %v79 = vrot.slane %v41, %v78
    %vm80 = vcmask 130048
    %v82 = vsel %vm80, %v38, 0
    %84 = vmatprep.subr.mxu0 0.0
    %85 = vmatpush1.msra.mxu0 0.0
    %86 = vmatprep.subr.mxu0 0.0
    %87 = vmatpush1.msra.mxu0 0.0
    %88 = vmatprep.subr.mxu0 0.0
    %89 = vmatpush1.msra.mxu0 0.0
    %90 = vmatprep.subr.mxu0 0.0
    %91 = vmatpush1.msra.mxu0 0.0
    %92 = vmatprep.subr.mxu0 0.0
    %93 = vmatpush1.msra.mxu0 0.0
    %94 = vmatprep.subr.mxu0 0.0
    %95 = vmatpush1.msra.mxu0 0.0
    %96 = vmatprep.subr.mxu0 0.0
    %97 = vmatpush1.msra.mxu0 0.0
    %98 = vmatprep.subr.mxu0 0.0
    %99 = vmatpush1.msra.mxu0 0.0
    %100 = vmatprep.subr.mxu0 0.0
    %101 = vmatpush1.msra.mxu0 0.0
    %102 = vmatprep.subr.mxu0 0.0
    %103 = vmatpush1.msra.mxu0 0.0
    %104 = vmatprep.subr.mxu0 0.0
    %105 = vmatpush1.msra.mxu0 0.0
    %106 = vmatprep.subr.mxu0 0.0
    %107 = vmatpush1.msra.mxu0 0.0
    %108 = vmatprep.subr.mxu0 0.0
    %109 = vmatpush1.msra.mxu0 0.0
    %110 = vmatprep.subr.mxu0 0.0
    %111 = vmatpush1.msra.mxu0 0.0
    %112 = vmatprep.subr.mxu0 0.0
    %113 = vmatpush1.msra.mxu0 %v40
    %114 = vmatprep.subr.mxu0 0.0
    %115 = vmatpush1.msra.mxu0 %v39
    %116 = vmatprep.subr.mxu0 0.0
    %117 = vmatpush2.msra.mxu0 0.0
    %118 = vmatprep.subr.mxu0 0.0
    %119 = vmatpush2.msra.mxu0 0.0
    %120 = vmatprep.subr.mxu0 0.0
    %121 = vmatpush2.msra.mxu0 0.0
    %122 = vmatprep.subr.mxu0 0.0
    %123 = vmatpush2.msra.mxu0 0.0
    %124 = vmatprep.subr.mxu0 0.0
    %125 = vmatpush2.msra.mxu0 0.0
    %126 = vmatprep.subr.mxu0 0.0
    %127 = vmatpush2.msra.mxu0 0.0
    %128 = vmatprep.subr.mxu0 0.0
    %129 = vmatpush2.msra.mxu0 0.0
    %130 = vmatprep.subr.mxu0 0.0
    %131 = vmatpush2.msra.mxu0 0.0
    %132 = vmatprep.subr.mxu0 0.0
    %133 = vmatpush2.msra.mxu0 0.0
    %134 = vmatprep.subr.mxu0 0.0
    %135 = vmatpush2.msra.mxu0 0.0
    %136 = vmatprep.subr.mxu0 0.0
    %137 = vmatpush2.msra.mxu0 0.0
    %138 = vmatprep.subr.mxu0 0.0
    %139 = vmatpush2.msra.mxu0 0.0
    %140 = vmatprep.subr.mxu0 0.0
    %141 = vmatpush2.msra.mxu0 0.0
    %142 = vmatprep.subr.mxu0 0.0
    %143 = vmatpush2.msra.mxu0 0.0
    %144 = vmatprep.subr.mxu0 0.0
    %145 = vmatpush2.msra.mxu0 0.0
    %146 = vmatprep.subr.mxu0 0.0
    %147 = vmatpush2.msra.mxu0 0.0
    %148 = vmatprep.mubr.f32.mxu0 0.0
    %149 = vmatmul.mubr.f32.gmra.mxu0 %v82
    %v150 = vpop.f32.mrf.mxu0
    %v151 = vadd.f32 %v79, %v150
    %v152 = vpop.f32.mrf.mxu0
    %153 = vdwg.mxu0
    %v154 = vmax.f32 %v151, 0.0
    %v155 = vlaneseq
    %v156 = vshrl.u32 %v155, 7
    %v157 = vsub.s32 0, %v156
    %v158 = vrot.slane %v58, %v157
    %159 = vmatprep.subr.mxu0 0.0
    %160 = vmatpush1.msra.mxu0 %v57
    %161 = vmatprep.subr.mxu0 0.0
    %162 = vmatpush1.msra.mxu0 %v56
    %163 = vmatprep.subr.mxu0 0.0
    %164 = vmatpush1.msra.mxu0 %v55
    %165 = vmatprep.subr.mxu0 0.0
    %166 = vmatpush1.msra.mxu0 %v54
    %167 = vmatprep.subr.mxu0 0.0
    %168 = vmatpush1.msra.mxu0 %v53
    %169 = vmatprep.subr.mxu0 0.0
    %170 = vmatpush1.msra.mxu0 %v52
    %171 = vmatprep.subr.mxu0 0.0
    %172 = vmatpush1.msra.mxu0 %v51
    %173 = vmatprep.subr.mxu0 0.0
    %174 = vmatpush1.msra.mxu0 %v50
    %175 = vmatprep.subr.mxu0 0.0
    %176 = vmatpush1.msra.mxu0 %v49
    %177 = vmatprep.subr.mxu0 0.0
    %178 = vmatpush1.msra.mxu0 %v48
    %179 = vmatprep.subr.mxu0 0.0
    %180 = vmatpush1.msra.mxu0 %v47
    %181 = vmatprep.subr.mxu0 0.0
    %182 = vmatpush1.msra.mxu0 %v46
    %183 = vmatprep.subr.mxu0 0.0
    %184 = vmatpush1.msra.mxu0 %v45
    %185 = vmatprep.subr.mxu0 0.0
    %186 = vmatpush1.msra.mxu0 %v44
    %187 = vmatprep.subr.mxu0 0.0
    %188 = vmatpush1.msra.mxu0 %v43
    %189 = vmatprep.subr.mxu0 0.0
    %190 = vmatpush1.msra.mxu0 %v42
    %191 = vmatprep.subr.mxu0 0.0
    %192 = vmatpush2.msra.mxu0 0.0
    %193 = vmatprep.subr.mxu0 0.0
    %194 = vmatpush2.msra.mxu0 0.0
    %195 = vmatprep.subr.mxu0 0.0
    %196 = vmatpush2.msra.mxu0 0.0
    %197 = vmatprep.subr.mxu0 0.0
    %198 = vmatpush2.msra.mxu0 0.0
    %199 = vmatprep.subr.mxu0 0.0
    %200 = vmatpush2.msra.mxu0 0.0
    %201 = vmatprep.subr.mxu0 0.0
    %202 = vmatpush2.msra.mxu0 0.0
    %203 = vmatprep.subr.mxu0 0.0
    %204 = vmatpush2.msra.mxu0 0.0
    %205 = vmatprep.subr.mxu0 0.0
    %206 = vmatpush2.msra.mxu0 0.0
    %207 = vmatprep.subr.mxu0 0.0
    %208 = vmatpush2.msra.mxu0 0.0
    %209 = vmatprep.subr.mxu0 0.0
    %210 = vmatpush2.msra.mxu0 0.0
    %211 = vmatprep.subr.mxu0 0.0
    %212 = vmatpush2.msra.mxu0 0.0
    %213 = vmatprep.subr.mxu0 0.0
    %214 = vmatpush2.msra.mxu0 0.0
    %215 = vmatprep.subr.mxu0 0.0
    %216 = vmatpush2.msra.mxu0 0.0
    %217 = vmatprep.subr.mxu0 0.0
    %218 = vmatpush2.msra.mxu0 0.0
    %219 = vmatprep.subr.mxu0 0.0
    %220 = vmatpush2.msra.mxu0 0.0
    %221 = vmatprep.subr.mxu0 0.0
    %222 = vmatpush2.msra.mxu0 0.0
    %223 = vmatprep.mubr.f32.mxu0 0.0
    %224 = vmatmul.mubr.f32.gmra.mxu0 %v154
    %v225 = vpop.f32.mrf.mxu0
    %v226 = vadd.f32 %v158, %v225
    %v227 = vpop.f32.mrf.mxu0
    %228 = vdwg.mxu0
    %v229 = vmax.f32 %v226, 0.0
    %v230 = vlaneseq
    %v231 = vshrl.u32 %v230, 7
    %v232 = vsub.s32 0, %v231
    %v233 = vrot.slane %v75, %v232
    %234 = vmatprep.subr.mxu0 0.0
    %235 = vmatpush1.msra.mxu0 %v74
    %236 = vmatprep.subr.mxu0 0.0
    %237 = vmatpush1.msra.mxu0 %v73
    %238 = vmatprep.subr.mxu0 0.0
    %239 = vmatpush1.msra.mxu0 %v72
    %240 = vmatprep.subr.mxu0 0.0
    %241 = vmatpush1.msra.mxu0 %v71
    %242 = vmatprep.subr.mxu0 0.0
    %243 = vmatpush1.msra.mxu0 %v70
    %244 = vmatprep.subr.mxu0 0.0
    %245 = vmatpush1.msra.mxu0 %v69
    %246 = vmatprep.subr.mxu0 0.0
    %247 = vmatpush1.msra.mxu0 %v68
    %248 = vmatprep.subr.mxu0 0.0
    %249 = vmatpush1.msra.mxu0 %v67
    %250 = vmatprep.subr.mxu0 0.0
    %251 = vmatpush1.msra.mxu0 %v66
    %252 = vmatprep.subr.mxu0 0.0
    %253 = vmatpush1.msra.mxu0 %v65
    %254 = vmatprep.subr.mxu0 0.0
    %255 = vmatpush1.msra.mxu0 %v64
    %256 = vmatprep.subr.mxu0 0.0
    %257 = vmatpush1.msra.mxu0 %v63
    %258 = vmatprep.subr.mxu0 0.0
    %259 = vmatpush1.msra.mxu0 %v62
    %260 = vmatprep.subr.mxu0 0.0
    %261 = vmatpush1.msra.mxu0 %v61
    %262 = vmatprep.subr.mxu0 0.0
    %263 = vmatpush1.msra.mxu0 %v60
    %264 = vmatprep.subr.mxu0 0.0
    %265 = vmatpush1.msra.mxu0 %v59
    %266 = vmatprep.subr.mxu0 0.0
    %267 = vmatpush2.msra.mxu0 0.0
    %268 = vmatprep.subr.mxu0 0.0
    %269 = vmatpush2.msra.mxu0 0.0
    %270 = vmatprep.subr.mxu0 0.0
    %271 = vmatpush2.msra.mxu0 0.0
    %272 = vmatprep.subr.mxu0 0.0
    %273 = vmatpush2.msra.mxu0 0.0
    %274 = vmatprep.subr.mxu0 0.0
    %275 = vmatpush2.msra.mxu0 0.0
    %276 = vmatprep.subr.mxu0 0.0
    %277 = vmatpush2.msra.mxu0 0.0
    %278 = vmatprep.subr.mxu0 0.0
    %279 = vmatpush2.msra.mxu0 0.0
    %280 = vmatprep.subr.mxu0 0.0
    %281 = vmatpush2.msra.mxu0 0.0
    %282 = vmatprep.subr.mxu0 0.0
    %283 = vmatpush2.msra.mxu0 0.0
    %284 = vmatprep.subr.mxu0 0.0
    %285 = vmatpush2.msra.mxu0 0.0
    %286 = vmatprep.subr.mxu0 0.0
    %287 = vmatpush2.msra.mxu0 0.0
    %288 = vmatprep.subr.mxu0 0.0
    %289 = vmatpush2.msra.mxu0 0.0
    %290 = vmatprep.subr.mxu0 0.0
    %291 = vmatpush2.msra.mxu0 0.0
    %292 = vmatprep.subr.mxu0 0.0
    %293 = vmatpush2.msra.mxu0 0.0
    %294 = vmatprep.subr.mxu0 0.0
    %295 = vmatpush2.msra.mxu0 0.0
    %296 = vmatprep.subr.mxu0 0.0
    %297 = vmatpush2.msra.mxu0 0.0
    %298 = vmatprep.mubr.f32.mxu0 0.0
    %299 = vmatmul.mubr.f32.gmra.mxu0 %v229
    %v300 = vpop.f32.mrf.mxu0
    %v301 = vadd.f32 %v233, %v300
    %v302 = vpop.f32.mrf.mxu0
    %303 = vdwg.mxu0
    %304 = vst [vmem:[#allocation7] sm:$0xff] %v301
    // Predicated region
    $region18: #{tpu_custom_call.1} parent=1 // pred_check
      _
    $region19: #{tpu_custom_call.1} parent=1 // pred_check_branch
      %306 = sbr.rel (0) target = $region21
    $region20: #{tpu_custom_call.1} parent=1 // pred_region
      %s308 = ssub.s32 128, 128
      %309 = vsyncadd [#allocation4], %s308
      %s311 = sshll.u32 [#allocation7], 4
      %s312 = int_to_ptr.vmem [resolvable:$true] %s311
      %314 = dma.vmem_to_hbm [thread:$0]  %s312, 128, %s2, [#allocation4]
    $region21: #{tpu_custom_call.1} parent=1 // pred_fallthru
      _
    // Predicated region
    $region22: #{tpu_custom_call.1} parent=1 // pred_check
      _
    $region23: #{tpu_custom_call.1} parent=1 // pred_check_branch
      %316 = sbr.rel (0) target = $region25
    $region24: #{tpu_custom_call.1} parent=1 // pred_region
      %317 = dma.done [#allocation4], 128
    $region25: #{tpu_custom_call.1} parent=1 // pred_fallthru
      _
    %318 = vsyncpa [#allocation3], 1
    %319 = vsyncpa [#allocation6], 1
    %320 = vsyncpa [#allocation4], 1

</llo_original>
